<compile_context>
chip_gen: v5e
topology: v5e:2x2
jax: 0.10.0
libtpu: 0.0.40
codegen_flags: <defaults>
</compile_context>

<pallas_src>
import functools
import math

import jax
import jax.numpy as jnp
from jax.experimental import pallas as pl
from jax.experimental.pallas import tpu as pltpu

EPS = 1e-5  # PyTorch BatchNorm2d default eps


# --------------------------------------------------------------------------
# Pallas kernel: fused BN1+ReLU -> 1x1 conv -> BN2+ReLU -> padded 3x3 conv
# --------------------------------------------------------------------------
def _bottleneck_kernel(x_ref, s1_ref, t1_ref, w1_ref, s2_ref, t2_ref,
                       w2_ref, mask_ref, y_ref, *, img_w):
    """One image per grid step, channel-major (C, HW) layout.

    x_ref:    (1, Cin, HW) f32   flattened NCHW image
    s1/t1:    (Cin, 1)     f32   folded BN1 scale / shift
    w1_ref:   (C4, Cin)    bf16  1x1 conv as matmul
    s2/t2:    (C4, 1)      f32   folded BN2 scale / shift
    w2_ref:   (9, G, C4)   bf16  3x3 taps, tap t = kh*3 + kw
    mask_ref: (9, 1, HW)   f32   zero-padding boundary mask per tap
    y_ref:    (1, G, HW)   f32   conv2 output (concat with x done in XLA)
    """
    hw = x_ref.shape[2]

    x = x_ref[0]                                                # (Cin, HW)
    # BN1 (folded) + ReLU, f32 elementwise (v5e has no bf16 VPU).
    z = jnp.maximum(x * s1_ref[...] + t1_ref[...], 0.0)
    # 1x1 conv on the MXU: bf16 operands, f32 accumulation.
    a = jnp.dot(w1_ref[...], z.astype(jnp.bfloat16),
                preferred_element_type=jnp.float32)             # (C4, HW)
    # BN2 (folded) + ReLU.
    a = jnp.maximum(a * s2_ref[...] + t2_ref[...], 0.0)
    a = a.astype(jnp.bfloat16)

    # Padded 3x3 conv, reassociated as roll(W_t @ a) * mask_t:
    # channel mixing first (small matmuls), then the spatial shift is a
    # lane roll of the small (G, HW) result; the 0/1 mask implements both the
    # zero padding and the roll wrap-around.  Fully unrolled (9 taps).
    acc = None
    t = 0
    for di in (-1, 0, 1):          # kh = di + 1
        for dj in (-1, 0, 1):      # kw = dj + 1
            b_t = jnp.dot(w2_ref[t], a,
                          preferred_element_type=jnp.float32)   # (G, HW) f32
            off = di * img_w + dj                               # flat HW shift
            if off != 0:
                # want shifted[i] = b_t[i + off]  ->  roll by -off
                b_t = pltpu.roll(b_t, shift=(-off) % hw, axis=1)
                b_t = b_t * mask_ref[t]
            acc = b_t if acc is None else acc + b_t
            t += 1

    y_ref[0] = acc.astype(y_ref.dtype)


def bottleneck_pallas(x_flat, s1, t1, w1, s2, t2, w2, masks, *, img_w):
    B, cin, HW = x_flat.shape
    c4 = w1.shape[0]
    g = w2.shape[1]
    kernel = functools.partial(_bottleneck_kernel, img_w=img_w)
    return pl.pallas_call(
        kernel,
        out_shape=jax.ShapeDtypeStruct((B, g, HW), jnp.float32),
        grid_spec=pltpu.PrefetchScalarGridSpec(
            num_scalar_prefetch=0,
            grid=(B,),
            in_specs=[
                pl.BlockSpec((1, cin, HW), lambda b: (b, 0, 0)),  # x (image)
                pl.BlockSpec((cin, 1), lambda b: (0, 0)),         # bn1 scale
                pl.BlockSpec((cin, 1), lambda b: (0, 0)),         # bn1 shift
                pl.BlockSpec((c4, cin), lambda b: (0, 0)),        # conv1 w
                pl.BlockSpec((c4, 1), lambda b: (0, 0)),          # bn2 scale
                pl.BlockSpec((c4, 1), lambda b: (0, 0)),          # bn2 shift
                pl.BlockSpec((9, g, c4), lambda b: (0, 0, 0)),    # conv2 taps
                pl.BlockSpec((9, 1, HW), lambda b: (0, 0, 0)),    # tap masks
            ],
            out_specs=pl.BlockSpec((1, g, HW), lambda b: (b, 0, 0)),
        ),
        compiler_params=pltpu.CompilerParams(
            dimension_semantics=("parallel",)),
    )(x_flat, s1, t1, w1, s2, t2, w2, masks)


# --------------------------------------------------------------------------
# One-time parameter packing (no transposes inside the jitted forward)
# --------------------------------------------------------------------------
def init_params(key, in_planes, growth_rate):
    """Raw parameters in PyTorch layouts."""
    c4 = 4 * growth_rate
    ks = jax.random.split(key, 10)
    u = jax.random.uniform
    p = {
        "bn1_gamma": u(ks[0], (in_planes,), jnp.float32, 0.5, 1.5),
        "bn1_beta":  u(ks[1], (in_planes,), jnp.float32, -0.5, 0.5),
        "bn1_mean":  u(ks[2], (in_planes,), jnp.float32, -0.5, 0.5),
        "bn1_var":   u(ks[3], (in_planes,), jnp.float32, 0.5, 1.5),
        "bn2_gamma": u(ks[4], (c4,), jnp.float32, 0.5, 1.5),
        "bn2_beta":  u(ks[5], (c4,), jnp.float32, -0.5, 0.5),
        "bn2_mean":  u(ks[6], (c4,), jnp.float32, -0.5, 0.5),
        "bn2_var":   u(ks[7], (c4,), jnp.float32, 0.5, 1.5),
    }
    b1 = 1.0 / math.sqrt(in_planes)
    p["conv1_w"] = u(ks[8], (c4, in_planes, 1, 1), jnp.float32, -b1, b1)
    b2 = 1.0 / math.sqrt(c4 * 9)
    p["conv2_w"] = u(ks[9], (growth_rate, c4, 3, 3), jnp.float32, -b2, b2)
    return p


def make_tap_masks(H, W, dtype=jnp.float32):
    """(9, 1, H*W) 0/1 masks: valid positions for each 3x3 tap (zero pad)."""
    hh = jnp.arange(H)[:, None]
    ww = jnp.arange(W)[None, :]
    masks = []
    for di in (-1, 0, 1):
        for dj in (-1, 0, 1):
            valid = ((hh + di >= 0) & (hh + di < H) &
                     (ww + dj >= 0) & (ww + dj < W))
            masks.append(valid.reshape(1, H * W))
    return jnp.stack(masks).astype(dtype)


def pack_params(raw, H, W):
    """Fold BN (eval-mode) into scale/shift; pre-pack conv weights as bf16."""
    c4, cin = raw["conv1_w"].shape[:2]
    g = raw["conv2_w"].shape[0]
    s1 = raw["bn1_gamma"] / jnp.sqrt(raw["bn1_var"] + EPS)
    t1 = raw["bn1_beta"] - raw["bn1_mean"] * s1
    s2 = raw["bn2_gamma"] / jnp.sqrt(raw["bn2_var"] + EPS)
    t2 = raw["bn2_beta"] - raw["bn2_mean"] * s2
    w1 = raw["conv1_w"].reshape(c4, cin).astype(jnp.bfloat16)        # (C4,Cin)
    w2 = jnp.transpose(raw["conv2_w"], (2, 3, 0, 1)).reshape(
        9, g, c4).astype(jnp.bfloat16)                               # (9,G,C4)
    return {
        "s1": s1.reshape(cin, 1), "t1": t1.reshape(cin, 1),
        "s2": s2.reshape(c4, 1), "t2": t2.reshape(c4, 1),
        "w1": w1, "w2": w2,
        "masks": make_tap_masks(H, W),
    }


# --------------------------------------------------------------------------
# Forward pass (matches Bottleneck.forward semantics, eval-mode BN)
# --------------------------------------------------------------------------
def bottleneck_forward(packed, x_nchw):
    B, cin, H, Wd = x_nchw.shape
    x_flat = x_nchw.reshape(B, cin, H * Wd)          # pure reshape, no copy
    y_flat = bottleneck_pallas(x_flat, packed["s1"], packed["t1"],
                               packed["w1"], packed["s2"], packed["t2"],
                               packed["w2"], packed["masks"], img_w=Wd)
    g = y_flat.shape[1]
    y = y_flat.reshape(B, g, H, Wd)
    # TODO(synk): concat could be fused into the kernel store, but G=12 is not
    # 8-sublane aligned; left to XLA for robustness (negligible at this size).
    return jnp.concatenate([y, x_nchw], axis=1)       # torch.cat([y, x], 1)


# Pure-XLA reference (same eval-mode BN folding) for a correctness check.
def bottleneck_reference(raw, x_nchw):
    s1 = raw["bn1_gamma"] / jnp.sqrt(raw["bn1_var"] + EPS)
    t1 = raw["bn1_beta"] - raw["bn1_mean"] * s1
    z = jnp.maximum(x_nchw * s1[None, :, None, None]
                    + t1[None, :, None, None], 0.0)
    y = jax.lax.conv_general_dilated(
        z, raw["conv1_w"], (1, 1), "VALID",
        dimension_numbers=("NCHW", "OIHW", "NCHW"))
    s2 = raw["bn2_gamma"] / jnp.sqrt(raw["bn2_var"] + EPS)
    t2 = raw["bn2_beta"] - raw["bn2_mean"] * s2
    y = jnp.maximum(y * s2[None, :, None, None]
                    + t2[None, :, None, None], 0.0)
    y = jax.lax.conv_general_dilated(
        y, raw["conv2_w"], (1, 1), ((1, 1), (1, 1)),
        dimension_numbers=("NCHW", "OIHW", "NCHW"))
    return jnp.concatenate([y, x_nchw], axis=1)


if __name__ == "__main__":
    B, IN_PLANES, H, W = 2, 24, 16, 16
    GROWTH = 12

    key = jax.random.PRNGKey(0)
    k_param, k_x = jax.random.split(key)
    raw = init_params(k_param, IN_PLANES, GROWTH)
    packed = pack_params(raw, H, W)                 # one-time packing
    x = jax.random.normal(k_x, (B, IN_PLANES, H, W), jnp.float32)

    fwd = jax.jit(bottleneck_forward)
    out = jax.block_until_ready(fwd(packed, x))

    assert out.shape == (B, GROWTH + IN_PLANES, H, W)
    assert bool(jnp.all(jnp.isfinite(out)))

    ref = jax.block_until_ready(bottleneck_reference(raw, x))
    max_err = float(jnp.max(jnp.abs(out - ref)))
    assert jnp.allclose(out, ref, atol=5e-2, rtol=5e-2), max_err

    print("KERNEL_OK")
</pallas_src>

<mosaic_0001>
module attributes {stable_mosaic.version = 11 : i64} {
  func.func @_bottleneck_kernel(%arg0: i32, %arg1: memref<1x24x256xf32, #tpu.memory_space<vmem>>, %arg2: memref<24x1xf32, #tpu.memory_space<vmem>>, %arg3: memref<24x1xf32, #tpu.memory_space<vmem>>, %arg4: memref<48x24xbf16, #tpu.memory_space<vmem>>, %arg5: memref<48x1xf32, #tpu.memory_space<vmem>>, %arg6: memref<48x1xf32, #tpu.memory_space<vmem>>, %arg7: memref<9x12x48xbf16, #tpu.memory_space<vmem>>, %arg8: memref<9x1x256xf32, #tpu.memory_space<vmem>>, %arg9: memref<1x12x256xf32, #tpu.memory_space<vmem>>) attributes {dimension_semantics = [#tpu.dimension_semantics<parallel>], iteration_bounds = array<i64: 2>, scalar_prefetch = 0 : i64, scratch_operands = 0 : i64, tpu.core_type = #tpu.core_type<tc>, window_params = [{transform_indices = @transform_0, window_bounds = array<i64: 1, 24, 256>}, {pipeline_mode = #tpu.pipeline_mode<synchronous>, transform_indices = @transform_1, window_bounds = array<i64: 24, 1>}, {pipeline_mode = #tpu.pipeline_mode<synchronous>, transform_indices = @transform_2, window_bounds = array<i64: 24, 1>}, {pipeline_mode = #tpu.pipeline_mode<synchronous>, transform_indices = @transform_3, window_bounds = array<i64: 48, 24>}, {pipeline_mode = #tpu.pipeline_mode<synchronous>, transform_indices = @transform_4, window_bounds = array<i64: 48, 1>}, {pipeline_mode = #tpu.pipeline_mode<synchronous>, transform_indices = @transform_5, window_bounds = array<i64: 48, 1>}, {pipeline_mode = #tpu.pipeline_mode<synchronous>, transform_indices = @transform_6, window_bounds = array<i64: 9, 12, 48>}, {pipeline_mode = #tpu.pipeline_mode<synchronous>, transform_indices = @transform_7, window_bounds = array<i64: 9, 1, 256>}, {transform_indices = @transform_8, window_bounds = array<i64: 1, 12, 256>}]} {
    %c0 = arith.constant 0 : index
    %c0_0 = arith.constant 0 : index
    %c0_1 = arith.constant 0 : index
    %0 = vector.load %arg1[%c0, %c0_0, %c0_1] : memref<1x24x256xf32, #tpu.memory_space<vmem>>, vector<1x24x256xf32>
    %1 = vector.shape_cast %0 : vector<1x24x256xf32> to vector<24x256xf32>
    %c0_2 = arith.constant 0 : index
    %c0_3 = arith.constant 0 : index
    %2 = vector.load %arg2[%c0_2, %c0_3] : memref<24x1xf32, #tpu.memory_space<vmem>>, vector<24x1xf32>
    %3 = vector.broadcast %2 : vector<24x1xf32> to vector<24x256xf32>
    %4 = arith.mulf %1, %3 : vector<24x256xf32>
    %c0_4 = arith.constant 0 : index
    %c0_5 = arith.constant 0 : index
    %5 = vector.load %arg3[%c0_4, %c0_5] : memref<24x1xf32, #tpu.memory_space<vmem>>, vector<24x1xf32>
    %6 = vector.broadcast %5 : vector<24x1xf32> to vector<24x256xf32>
    %7 = arith.addf %4, %6 : vector<24x256xf32>
    %cst = arith.constant 0.000000e+00 : f32
    %8 = vector.broadcast %cst : f32 to vector<24x256xf32>
    %9 = arith.maximumf %7, %8 : vector<24x256xf32>
    %c0_6 = arith.constant 0 : index
    %c0_7 = arith.constant 0 : index
    %10 = vector.load %arg4[%c0_6, %c0_7] : memref<48x24xbf16, #tpu.memory_space<vmem>>, vector<48x24xbf16>
    %11 = arith.truncf %9 : vector<24x256xf32> to vector<24x256xbf16>
    %cst_8 = arith.constant dense<0.000000e+00> : vector<48x256xf32>
    %12 = tpu.matmul %10, %11, %cst_8 {dimension_numbers = #tpu.dot_dimension_numbers<[1], [0], [0], [1], [0, 0, 1, 1], [], []>} : vector<48x24xbf16>, vector<24x256xbf16>, vector<48x256xf32> -> vector<48x256xf32>
    %c0_9 = arith.constant 0 : index
    %c0_10 = arith.constant 0 : index
    %13 = vector.load %arg5[%c0_9, %c0_10] : memref<48x1xf32, #tpu.memory_space<vmem>>, vector<48x1xf32>
    %14 = vector.broadcast %13 : vector<48x1xf32> to vector<48x256xf32>
    %15 = arith.mulf %12, %14 : vector<48x256xf32>
    %c0_11 = arith.constant 0 : index
    %c0_12 = arith.constant 0 : index
    %16 = vector.load %arg6[%c0_11, %c0_12] : memref<48x1xf32, #tpu.memory_space<vmem>>, vector<48x1xf32>
    %17 = vector.broadcast %16 : vector<48x1xf32> to vector<48x256xf32>
    %18 = arith.addf %15, %17 : vector<48x256xf32>
    %cst_13 = arith.constant 0.000000e+00 : f32
    %19 = vector.broadcast %cst_13 : f32 to vector<48x256xf32>
    %20 = arith.maximumf %18, %19 : vector<48x256xf32>
    %21 = arith.truncf %20 : vector<48x256xf32> to vector<48x256xbf16>
    %c0_14 = arith.constant 0 : index
    %c0_15 = arith.constant 0 : index
    %c0_16 = arith.constant 0 : index
    %22 = vector.load %arg7[%c0_14, %c0_15, %c0_16] : memref<9x12x48xbf16, #tpu.memory_space<vmem>>, vector<1x12x48xbf16>
    %23 = vector.shape_cast %22 : vector<1x12x48xbf16> to vector<12x48xbf16>
    %cst_17 = arith.constant dense<0.000000e+00> : vector<12x256xf32>
    %24 = tpu.matmul %23, %21, %cst_17 {dimension_numbers = #tpu.dot_dimension_numbers<[1], [0], [0], [1], [0, 0, 1, 1], [], []>} : vector<12x48xbf16>, vector<48x256xbf16>, vector<12x256xf32> -> vector<12x256xf32>
    %c17_i32 = arith.constant 17 : i32
    %25 = tpu.dynamic_rotate %24 by %c17_i32 dim 1 : vector<12x256xf32>, i32 -> vector<12x256xf32>
    %c0_18 = arith.constant 0 : index
    %c0_19 = arith.constant 0 : index
    %c0_20 = arith.constant 0 : index
    %26 = vector.load %arg8[%c0_18, %c0_19, %c0_20] : memref<9x1x256xf32, #tpu.memory_space<vmem>>, vector<1x1x256xf32>
    %27 = vector.shape_cast %26 : vector<1x1x256xf32> to vector<1x256xf32>
    %28 = vector.broadcast %27 : vector<1x256xf32> to vector<12x256xf32>
    %29 = arith.mulf %25, %28 : vector<12x256xf32>
    %c1 = arith.constant 1 : index
    %c0_21 = arith.constant 0 : index
    %c0_22 = arith.constant 0 : index
    %30 = vector.load %arg7[%c1, %c0_21, %c0_22] : memref<9x12x48xbf16, #tpu.memory_space<vmem>>, vector<1x12x48xbf16>
    %31 = vector.shape_cast %30 : vector<1x12x48xbf16> to vector<12x48xbf16>
    %cst_23 = arith.constant dense<0.000000e+00> : vector<12x256xf32>
    %32 = tpu.matmul %31, %21, %cst_23 {dimension_numbers = #tpu.dot_dimension_numbers<[1], [0], [0], [1], [0, 0, 1, 1], [], []>} : vector<12x48xbf16>, vector<48x256xbf16>, vector<12x256xf32> -> vector<12x256xf32>
    %c16_i32 = arith.constant 16 : i32
    %33 = tpu.dynamic_rotate %32 by %c16_i32 dim 1 : vector<12x256xf32>, i32 -> vector<12x256xf32>
    %c1_24 = arith.constant 1 : index
    %c0_25 = arith.constant 0 : index
    %c0_26 = arith.constant 0 : index
    %34 = vector.load %arg8[%c1_24, %c0_25, %c0_26] : memref<9x1x256xf32, #tpu.memory_space<vmem>>, vector<1x1x256xf32>
    %35 = vector.shape_cast %34 : vector<1x1x256xf32> to vector<1x256xf32>
    %36 = vector.broadcast %35 : vector<1x256xf32> to vector<12x256xf32>
    %37 = arith.mulf %33, %36 : vector<12x256xf32>
    %38 = arith.addf %29, %37 : vector<12x256xf32>
    %c2 = arith.constant 2 : index
    %c0_27 = arith.constant 0 : index
    %c0_28 = arith.constant 0 : index
    %39 = vector.load %arg7[%c2, %c0_27, %c0_28] : memref<9x12x48xbf16, #tpu.memory_space<vmem>>, vector<1x12x48xbf16>
    %40 = vector.shape_cast %39 : vector<1x12x48xbf16> to vector<12x48xbf16>
    %cst_29 = arith.constant dense<0.000000e+00> : vector<12x256xf32>
    %41 = tpu.matmul %40, %21, %cst_29 {dimension_numbers = #tpu.dot_dimension_numbers<[1], [0], [0], [1], [0, 0, 1, 1], [], []>} : vector<12x48xbf16>, vector<48x256xbf16>, vector<12x256xf32> -> vector<12x256xf32>
    %c15_i32 = arith.constant 15 : i32
    %42 = tpu.dynamic_rotate %41 by %c15_i32 dim 1 : vector<12x256xf32>, i32 -> vector<12x256xf32>
    %c2_30 = arith.constant 2 : index
    %c0_31 = arith.constant 0 : index
    %c0_32 = arith.constant 0 : index
    %43 = vector.load %arg8[%c2_30, %c0_31, %c0_32] : memref<9x1x256xf32, #tpu.memory_space<vmem>>, vector<1x1x256xf32>
    %44 = vector.shape_cast %43 : vector<1x1x256xf32> to vector<1x256xf32>
    %45 = vector.broadcast %44 : vector<1x256xf32> to vector<12x256xf32>
    %46 = arith.mulf %42, %45 : vector<12x256xf32>
    %47 = arith.addf %38, %46 : vector<12x256xf32>
    %c3 = arith.constant 3 : index
    %c0_33 = arith.constant 0 : index
    %c0_34 = arith.constant 0 : index
    %48 = vector.load %arg7[%c3, %c0_33, %c0_34] : memref<9x12x48xbf16, #tpu.memory_space<vmem>>, vector<1x12x48xbf16>
    %49 = vector.shape_cast %48 : vector<1x12x48xbf16> to vector<12x48xbf16>
    %cst_35 = arith.constant dense<0.000000e+00> : vector<12x256xf32>
    %50 = tpu.matmul %49, %21, %cst_35 {dimension_numbers = #tpu.dot_dimension_numbers<[1], [0], [0], [1], [0, 0, 1, 1], [], []>} : vector<12x48xbf16>, vector<48x256xbf16>, vector<12x256xf32> -> vector<12x256xf32>
    %c1_i32 = arith.constant 1 : i32
    %51 = tpu.dynamic_rotate %50 by %c1_i32 dim 1 : vector<12x256xf32>, i32 -> vector<12x256xf32>
    %c3_36 = arith.constant 3 : index
    %c0_37 = arith.constant 0 : index
    %c0_38 = arith.constant 0 : index
    %52 = vector.load %arg8[%c3_36, %c0_37, %c0_38] : memref<9x1x256xf32, #tpu.memory_space<vmem>>, vector<1x1x256xf32>
    %53 = vector.shape_cast %52 : vector<1x1x256xf32> to vector<1x256xf32>
    %54 = vector.broadcast %53 : vector<1x256xf32> to vector<12x256xf32>
    %55 = arith.mulf %51, %54 : vector<12x256xf32>
    %56 = arith.addf %47, %55 : vector<12x256xf32>
    %c4 = arith.constant 4 : index
    %c0_39 = arith.constant 0 : index
    %c0_40 = arith.constant 0 : index
    %57 = vector.load %arg7[%c4, %c0_39, %c0_40] : memref<9x12x48xbf16, #tpu.memory_space<vmem>>, vector<1x12x48xbf16>
    %58 = vector.shape_cast %57 : vector<1x12x48xbf16> to vector<12x48xbf16>
    %cst_41 = arith.constant dense<0.000000e+00> : vector<12x256xf32>
    %59 = tpu.matmul %58, %21, %cst_41 {dimension_numbers = #tpu.dot_dimension_numbers<[1], [0], [0], [1], [0, 0, 1, 1], [], []>} : vector<12x48xbf16>, vector<48x256xbf16>, vector<12x256xf32> -> vector<12x256xf32>
    %60 = arith.addf %56, %59 : vector<12x256xf32>
    %c5 = arith.constant 5 : index
    %c0_42 = arith.constant 0 : index
    %c0_43 = arith.constant 0 : index
    %61 = vector.load %arg7[%c5, %c0_42, %c0_43] : memref<9x12x48xbf16, #tpu.memory_space<vmem>>, vector<1x12x48xbf16>
    %62 = vector.shape_cast %61 : vector<1x12x48xbf16> to vector<12x48xbf16>
    %cst_44 = arith.constant dense<0.000000e+00> : vector<12x256xf32>
    %63 = tpu.matmul %62, %21, %cst_44 {dimension_numbers = #tpu.dot_dimension_numbers<[1], [0], [0], [1], [0, 0, 1, 1], [], []>} : vector<12x48xbf16>, vector<48x256xbf16>, vector<12x256xf32> -> vector<12x256xf32>
    %c255_i32 = arith.constant 255 : i32
    %64 = tpu.dynamic_rotate %63 by %c255_i32 dim 1 : vector<12x256xf32>, i32 -> vector<12x256xf32>
    %c5_45 = arith.constant 5 : index
    %c0_46 = arith.constant 0 : index
    %c0_47 = arith.constant 0 : index
    %65 = vector.load %arg8[%c5_45, %c0_46, %c0_47] : memref<9x1x256xf32, #tpu.memory_space<vmem>>, vector<1x1x256xf32>
    %66 = vector.shape_cast %65 : vector<1x1x256xf32> to vector<1x256xf32>
    %67 = vector.broadcast %66 : vector<1x256xf32> to vector<12x256xf32>
    %68 = arith.mulf %64, %67 : vector<12x256xf32>
    %69 = arith.addf %60, %68 : vector<12x256xf32>
    %c6 = arith.constant 6 : index
    %c0_48 = arith.constant 0 : index
    %c0_49 = arith.constant 0 : index
    %70 = vector.load %arg7[%c6, %c0_48, %c0_49] : memref<9x12x48xbf16, #tpu.memory_space<vmem>>, vector<1x12x48xbf16>
    %71 = vector.shape_cast %70 : vector<1x12x48xbf16> to vector<12x48xbf16>
    %cst_50 = arith.constant dense<0.000000e+00> : vector<12x256xf32>
    %72 = tpu.matmul %71, %21, %cst_50 {dimension_numbers = #tpu.dot_dimension_numbers<[1], [0], [0], [1], [0, 0, 1, 1], [], []>} : vector<12x48xbf16>, vector<48x256xbf16>, vector<12x256xf32> -> vector<12x256xf32>
    %c241_i32 = arith.constant 241 : i32
    %73 = tpu.dynamic_rotate %72 by %c241_i32 dim 1 : vector<12x256xf32>, i32 -> vector<12x256xf32>
    %c6_51 = arith.constant 6 : index
    %c0_52 = arith.constant 0 : index
    %c0_53 = arith.constant 0 : index
    %74 = vector.load %arg8[%c6_51, %c0_52, %c0_53] : memref<9x1x256xf32, #tpu.memory_space<vmem>>, vector<1x1x256xf32>
    %75 = vector.shape_cast %74 : vector<1x1x256xf32> to vector<1x256xf32>
    %76 = vector.broadcast %75 : vector<1x256xf32> to vector<12x256xf32>
    %77 = arith.mulf %73, %76 : vector<12x256xf32>
    %78 = arith.addf %69, %77 : vector<12x256xf32>
    %c7 = arith.constant 7 : index
    %c0_54 = arith.constant 0 : index
    %c0_55 = arith.constant 0 : index
    %79 = vector.load %arg7[%c7, %c0_54, %c0_55] : memref<9x12x48xbf16, #tpu.memory_space<vmem>>, vector<1x12x48xbf16>
    %80 = vector.shape_cast %79 : vector<1x12x48xbf16> to vector<12x48xbf16>
    %cst_56 = arith.constant dense<0.000000e+00> : vector<12x256xf32>
    %81 = tpu.matmul %80, %21, %cst_56 {dimension_numbers = #tpu.dot_dimension_numbers<[1], [0], [0], [1], [0, 0, 1, 1], [], []>} : vector<12x48xbf16>, vector<48x256xbf16>, vector<12x256xf32> -> vector<12x256xf32>
    %c240_i32 = arith.constant 240 : i32
    %82 = tpu.dynamic_rotate %81 by %c240_i32 dim 1 : vector<12x256xf32>, i32 -> vector<12x256xf32>
    %c7_57 = arith.constant 7 : index
    %c0_58 = arith.constant 0 : index
    %c0_59 = arith.constant 0 : index
    %83 = vector.load %arg8[%c7_57, %c0_58, %c0_59] : memref<9x1x256xf32, #tpu.memory_space<vmem>>, vector<1x1x256xf32>
    %84 = vector.shape_cast %83 : vector<1x1x256xf32> to vector<1x256xf32>
    %85 = vector.broadcast %84 : vector<1x256xf32> to vector<12x256xf32>
    %86 = arith.mulf %82, %85 : vector<12x256xf32>
    %87 = arith.addf %78, %86 : vector<12x256xf32>
    %c8 = arith.constant 8 : index
    %c0_60 = arith.constant 0 : index
    %c0_61 = arith.constant 0 : index
    %88 = vector.load %arg7[%c8, %c0_60, %c0_61] : memref<9x12x48xbf16, #tpu.memory_space<vmem>>, vector<1x12x48xbf16>
    %89 = vector.shape_cast %88 : vector<1x12x48xbf16> to vector<12x48xbf16>
    %cst_62 = arith.constant dense<0.000000e+00> : vector<12x256xf32>
    %90 = tpu.matmul %89, %21, %cst_62 {dimension_numbers = #tpu.dot_dimension_numbers<[1], [0], [0], [1], [0, 0, 1, 1], [], []>} : vector<12x48xbf16>, vector<48x256xbf16>, vector<12x256xf32> -> vector<12x256xf32>
    %c239_i32 = arith.constant 239 : i32
    %91 = tpu.dynamic_rotate %90 by %c239_i32 dim 1 : vector<12x256xf32>, i32 -> vector<12x256xf32>
    %c8_63 = arith.constant 8 : index
    %c0_64 = arith.constant 0 : index
    %c0_65 = arith.constant 0 : index
    %92 = vector.load %arg8[%c8_63, %c0_64, %c0_65] : memref<9x1x256xf32, #tpu.memory_space<vmem>>, vector<1x1x256xf32>
    %93 = vector.shape_cast %92 : vector<1x1x256xf32> to vector<1x256xf32>
    %94 = vector.broadcast %93 : vector<1x256xf32> to vector<12x256xf32>
    %95 = arith.mulf %91, %94 : vector<12x256xf32>
    %96 = arith.addf %87, %95 : vector<12x256xf32>
    %c0_66 = arith.constant 0 : index
    %c0_67 = arith.constant 0 : index
    %c0_68 = arith.constant 0 : index
    %97 = vector.load %arg9[%c0_66, %c0_67, %c0_68] : memref<1x12x256xf32, #tpu.memory_space<vmem>>, vector<1x12x256xf32>
    %98 = vector.shape_cast %97 : vector<1x12x256xf32> to vector<12x256xf32>
    %99 = vector.shape_cast %96 : vector<12x256xf32> to vector<1x12x256xf32>
    tpu.vector_store %arg9[%c0_66, %c0_67, %c0_68], %99 {strides = array<i32>} : memref<1x12x256xf32, #tpu.memory_space<vmem>>, vector<1x12x256xf32>,
    return
  }
  func.func @transform_0(%arg0: i32) -> (i32, i32, i32) {
    %c0_i32 = arith.constant 0 : i32
    %c0_i32_0 = arith.constant 0 : i32
    %c0_i32_1 = arith.constant 0 : i32
    return %arg0, %c0_i32, %c0_i32_0 : i32, i32, i32
  }
  func.func @transform_1(%arg0: i32) -> (i32, i32) {
    %c0_i32 = arith.constant 0 : i32
    %c0_i32_0 = arith.constant 0 : i32
    %c0_i32_1 = arith.constant 0 : i32
    return %c0_i32, %c0_i32_0 : i32, i32
  }
  func.func @transform_2(%arg0: i32) -> (i32, i32) {
    %c0_i32 = arith.constant 0 : i32
    %c0_i32_0 = arith.constant 0 : i32
    %c0_i32_1 = arith.constant 0 : i32
    return %c0_i32, %c0_i32_0 : i32, i32
  }
  func.func @transform_3(%arg0: i32) -> (i32, i32) {
    %c0_i32 = arith.constant 0 : i32
    %c0_i32_0 = arith.constant 0 : i32
    %c0_i32_1 = arith.constant 0 : i32
    return %c0_i32, %c0_i32_0 : i32, i32
  }
  func.func @transform_4(%arg0: i32) -> (i32, i32) {
    %c0_i32 = arith.constant 0 : i32
    %c0_i32_0 = arith.constant 0 : i32
    %c0_i32_1 = arith.constant 0 : i32
    return %c0_i32, %c0_i32_0 : i32, i32
  }
  func.func @transform_5(%arg0: i32) -> (i32, i32) {
    %c0_i32 = arith.constant 0 : i32
    %c0_i32_0 = arith.constant 0 : i32
    %c0_i32_1 = arith.constant 0 : i32
    return %c0_i32, %c0_i32_0 : i32, i32
  }
  func.func @transform_6(%arg0: i32) -> (i32, i32, i32) {
    %c0_i32 = arith.constant 0 : i32
    %c0_i32_0 = arith.constant 0 : i32
    %c0_i32_1 = arith.constant 0 : i32
    %c0_i32_2 = arith.constant 0 : i32
    return %c0_i32, %c0_i32_0, %c0_i32_1 : i32, i32, i32
  }
  func.func @transform_7(%arg0: i32) -> (i32, i32, i32) {
    %c0_i32 = arith.constant 0 : i32
    %c0_i32_0 = arith.constant 0 : i32
    %c0_i32_1 = arith.constant 0 : i32
    %c0_i32_2 = arith.constant 0 : i32
    return %c0_i32, %c0_i32_0, %c0_i32_1 : i32, i32, i32
  }
  func.func @transform_8(%arg0: i32) -> (i32, i32, i32) {
    %c0_i32 = arith.constant 0 : i32
    %c0_i32_0 = arith.constant 0 : i32
    %c0_i32_1 = arith.constant 0 : i32
    return %arg0, %c0_i32, %c0_i32_0 : i32, i32, i32
  }
}

</mosaic_0001>

<llo_original>
// kernel: bottleneck_forward.1
$region0: #{bottleneck_forward.1}
  #allocation0 [shape = 'u32[]', space=smem, size = 0x4, offset = 0x4, fixed_abs, tag = 'smem constant byte address 0x4 - core index']
  #allocation1 [shape = 'u32[72,128]{1,0:T(1,128)}', space=vmem, size = 0x9000, scoped, tag = 'internal scratch']
  %s0 = inlined_call_operand.vmem [shape: f32[2,24,256], index: 0, kind: input, shape index: {}]
  %s1 = inlined_call_operand.vmem [shape: f32[24,1], index: 1, kind: input, shape index: {}]
  %s2 = inlined_call_operand.vmem [shape: f32[24,1], index: 2, kind: input, shape index: {}]
  %s3 = inlined_call_operand.vmem [shape: bf16[48,24], index: 3, kind: input, shape index: {}]
  %s4 = inlined_call_operand.vmem [shape: f32[48,1], index: 4, kind: input, shape index: {}]
  %s5 = inlined_call_operand.vmem [shape: f32[48,1], index: 5, kind: input, shape index: {}]
  %s6 = inlined_call_operand.vmem [shape: bf16[9,12,48], index: 6, kind: input, shape index: {}]
  %s7 = inlined_call_operand.vmem [shape: f32[9,1,256], index: 7, kind: input, shape index: {}]
  %s8 = inlined_call_operand.vmem [shape: f32[2,12,256], index: 8, kind: output, shape index: {}]
  %s9 = sld [smem:[#allocation0]]
  $region65: #{bottleneck_forward.1} parent=0
    _
  %s11 = ssub.s32 1, %s9
  %s12 = scalar_select 0, %s11, %s9
  loop: start=0, step=1, limit=4
  $region2: #{bottleneck_forward.1} parent=0 // loop_pre_header
    _
  $region3: #{bottleneck_forward.1} parent=0 // loop_header
    %s14 = sphi 0, %s18
    %p15 = scmp.ge.s32.totalorder %s14, 4
    %s24 = sphi 0, %s26
    %s27 = sphi 0, %s24
    %s28 = sphi 0, %s27
    %s44 = sphi 0, %s28
    %s48 = sphi 0, %s48
    %s50 = sphi 0, %s48
    %s51 = sphi 0, %s50
    %s65 = sphi 0, %s51
    %s69 = sphi 0, %s69
    %s71 = sphi 0, %s69
    %s72 = sphi 0, %s71
    %s86 = sphi 0, %s72
    %s90 = sphi 0, %s90
    %s92 = sphi 0, %s90
    %s93 = sphi 0, %s92
    %s107 = sphi 0, %s93
    %s111 = sphi 0, %s111
    %s113 = sphi 0, %s111
    %s114 = sphi 0, %s113
    %s128 = sphi 0, %s114
    %s132 = sphi 0, %s132
    %s134 = sphi 0, %s132
    %s135 = sphi 0, %s134
    %s149 = sphi 0, %s135
    %s153 = sphi 0, %s153
    %s155 = sphi 0, %s153
    %s156 = sphi 0, %s155
    %s170 = sphi 0, %s156
    %s174 = sphi 0, %s174
    %s176 = sphi 0, %s174
    %s177 = sphi 0, %s176
    %s191 = sphi 0, %s177
    %s197 = sphi 0, %s199
    %s200 = sphi 0, %s197
    %s201 = sphi 0, %s200
    %s217 = sphi 0, %s201
  $region4: #{bottleneck_forward.1} parent=0 // loop_header_branch
    %17 = sbr.rel (%p15) target = $region8
  $region5: #{bottleneck_forward.1} parent=0 // loop_body
    %s19 = ssub.s32 %s14, 1
    %s20 = ssub.s32 %s14, 2
    %s21 = sadd.s32 %s14, 1
    %s22 = ssub.s32 %s14, %s21
    %p23 = scmp.eq.s32.totalorder %s22, 0
    %s25 = sadd.s32 %s24, 1
    %s26 = scalar_select %p23, %s24, %s25
    %p29 = pneg %p23
    %p30 = scmp.eq.s32.totalorder %s14, 1
    %p31 = por %p29, %p30
    %p32 = scmp.ne.s32.totalorder %s24, %s27
    %p33 = scmp.eq.s32.totalorder %s14, 0
    %p34 = por %p32, %p33
    %p35 = scmp.ne.s32.totalorder %s24, %s27
    %p36 = scmp.eq.s32.totalorder %s19, 1
    %p37 = por %p35, %p36
    %p38 = scmp.ne.s32.totalorder %s27, %s28
    %p39 = scmp.eq.s32.totalorder %s19, 0
    %p40 = por %p38, %p39
    %p41 = scmp.ne.s32.totalorder %s27, %s28
    %p42 = scmp.eq.s32.totalorder %s20, 1
    %p43 = por %p41, %p42
    %p45 = scmp.ne.s32.totalorder %s28, %s44
    %p46 = scmp.eq.s32.totalorder %s20, 0
    %p47 = por %p45, %p46
    %s49 = sadd.s32 %s48, 1
    %p52 = scmp.eq.s32.totalorder %s14, 1
    %p53 = scmp.ne.s32.totalorder %s48, %s50
    %p54 = scmp.eq.s32.totalorder %s14, 0
    %p55 = por %p53, %p54
    %p56 = scmp.ne.s32.totalorder %s48, %s50
    %p57 = scmp.eq.s32.totalorder %s19, 1
    %p58 = por %p56, %p57
    %p59 = scmp.ne.s32.totalorder %s50, %s51
    %p60 = scmp.eq.s32.totalorder %s19, 0
    %p61 = por %p59, %p60
    %p62 = scmp.ne.s32.totalorder %s50, %s51
    %p63 = scmp.eq.s32.totalorder %s20, 1
    %p64 = por %p62, %p63
    %p66 = scmp.ne.s32.totalorder %s51, %s65
    %p67 = scmp.eq.s32.totalorder %s20, 0
    %p68 = por %p66, %p67
    %s70 = sadd.s32 %s69, 1
    %p73 = scmp.eq.s32.totalorder %s14, 1
    %p74 = scmp.ne.s32.totalorder %s69, %s71
    %p75 = scmp.eq.s32.totalorder %s14, 0
    %p76 = por %p74, %p75
    %p77 = scmp.ne.s32.totalorder %s69, %s71
    %p78 = scmp.eq.s32.totalorder %s19, 1
    %p79 = por %p77, %p78
    %p80 = scmp.ne.s32.totalorder %s71, %s72
    %p81 = scmp.eq.s32.totalorder %s19, 0
    %p82 = por %p80, %p81
    %p83 = scmp.ne.s32.totalorder %s71, %s72
    %p84 = scmp.eq.s32.totalorder %s20, 1
    %p85 = por %p83, %p84
    %p87 = scmp.ne.s32.totalorder %s72, %s86
    %p88 = scmp.eq.s32.totalorder %s20, 0
    %p89 = por %p87, %p88
    %s91 = sadd.s32 %s90, 1
    %p94 = scmp.eq.s32.totalorder %s14, 1
    %p95 = scmp.ne.s32.totalorder %s90, %s92
    %p96 = scmp.eq.s32.totalorder %s14, 0
    %p97 = por %p95, %p96
    %p98 = scmp.ne.s32.totalorder %s90, %s92
    %p99 = scmp.eq.s32.totalorder %s19, 1
    %p100 = por %p98, %p99
    %p101 = scmp.ne.s32.totalorder %s92, %s93
    %p102 = scmp.eq.s32.totalorder %s19, 0
    %p103 = por %p101, %p102
    %p104 = scmp.ne.s32.totalorder %s92, %s93
    %p105 = scmp.eq.s32.totalorder %s20, 1
    %p106 = por %p104, %p105
    %p108 = scmp.ne.s32.totalorder %s93, %s107
    %p109 = scmp.eq.s32.totalorder %s20, 0
    %p110 = por %p108, %p109
    %s112 = sadd.s32 %s111, 1
    %p115 = scmp.eq.s32.totalorder %s14, 1
    %p116 = scmp.ne.s32.totalorder %s111, %s113
    %p117 = scmp.eq.s32.totalorder %s14, 0
    %p118 = por %p116, %p117
    %p119 = scmp.ne.s32.totalorder %s111, %s113
    %p120 = scmp.eq.s32.totalorder %s19, 1
    %p121 = por %p119, %p120
    %p122 = scmp.ne.s32.totalorder %s113, %s114
    %p123 = scmp.eq.s32.totalorder %s19, 0
    %p124 = por %p122, %p123
    %p125 = scmp.ne.s32.totalorder %s113, %s114
    %p126 = scmp.eq.s32.totalorder %s20, 1
    %p127 = por %p125, %p126
    %p129 = scmp.ne.s32.totalorder %s114, %s128
    %p130 = scmp.eq.s32.totalorder %s20, 0
    %p131 = por %p129, %p130
    %s133 = sadd.s32 %s132, 1
    %p136 = scmp.eq.s32.totalorder %s14, 1
    %p137 = scmp.ne.s32.totalorder %s132, %s134
    %p138 = scmp.eq.s32.totalorder %s14, 0
    %p139 = por %p137, %p138
    %p140 = scmp.ne.s32.totalorder %s132, %s134
    %p141 = scmp.eq.s32.totalorder %s19, 1
    %p142 = por %p140, %p141
    %p143 = scmp.ne.s32.totalorder %s134, %s135
    %p144 = scmp.eq.s32.totalorder %s19, 0
    %p145 = por %p143, %p144
    %p146 = scmp.ne.s32.totalorder %s134, %s135
    %p147 = scmp.eq.s32.totalorder %s20, 1
    %p148 = por %p146, %p147
    %p150 = scmp.ne.s32.totalorder %s135, %s149
    %p151 = scmp.eq.s32.totalorder %s20, 0
    %p152 = por %p150, %p151
    %s154 = sadd.s32 %s153, 1
    %p157 = scmp.eq.s32.totalorder %s14, 1
    %p158 = scmp.ne.s32.totalorder %s153, %s155
    %p159 = scmp.eq.s32.totalorder %s14, 0
    %p160 = por %p158, %p159
    %p161 = scmp.ne.s32.totalorder %s153, %s155
    %p162 = scmp.eq.s32.totalorder %s19, 1
    %p163 = por %p161, %p162
    %p164 = scmp.ne.s32.totalorder %s155, %s156
    %p165 = scmp.eq.s32.totalorder %s19, 0
    %p166 = por %p164, %p165
    %p167 = scmp.ne.s32.totalorder %s155, %s156
    %p168 = scmp.eq.s32.totalorder %s20, 1
    %p169 = por %p167, %p168
    %p171 = scmp.ne.s32.totalorder %s156, %s170
    %p172 = scmp.eq.s32.totalorder %s20, 0
    %p173 = por %p171, %p172
    %s175 = sadd.s32 %s174, 1
    %p178 = scmp.eq.s32.totalorder %s14, 1
    %p179 = scmp.ne.s32.totalorder %s174, %s176
    %p180 = scmp.eq.s32.totalorder %s14, 0
    %p181 = por %p179, %p180
    %p182 = scmp.ne.s32.totalorder %s174, %s176
    %p183 = scmp.eq.s32.totalorder %s19, 1
    %p184 = por %p182, %p183
    %p185 = scmp.ne.s32.totalorder %s176, %s177
    %p186 = scmp.eq.s32.totalorder %s19, 0
    %p187 = por %p185, %p186
    %p188 = scmp.ne.s32.totalorder %s176, %s177
    %p189 = scmp.eq.s32.totalorder %s20, 1
    %p190 = por %p188, %p189
    %p192 = scmp.ne.s32.totalorder %s177, %s191
    %p193 = scmp.eq.s32.totalorder %s20, 0
    %p194 = por %p192, %p193
    %s195 = ssub.s32 %s14, %s21
    %p196 = scmp.eq.s32.totalorder %s195, 0
    %s198 = sadd.s32 %s197, 1
    %s199 = scalar_select %p196, %s197, %s198
    %p202 = pneg %p196
    %p203 = scmp.eq.s32.totalorder %s14, 1
    %p204 = por %p202, %p203
    %p205 = scmp.ne.s32.totalorder %s197, %s200
    %p206 = scmp.eq.s32.totalorder %s14, 0
    %p207 = por %p205, %p206
    %p208 = scmp.ne.s32.totalorder %s197, %s200
    %p209 = scmp.eq.s32.totalorder %s19, 1
    %p210 = por %p208, %p209
    %p211 = scmp.ne.s32.totalorder %s200, %s201
    %p212 = scmp.eq.s32.totalorder %s19, 0
    %p213 = por %p211, %p212
    %p214 = scmp.ne.s32.totalorder %s200, %s201
    %p215 = scmp.eq.s32.totalorder %s20, 1
    %p216 = por %p214, %p215
    %p218 = scmp.ne.s32.totalorder %s201, %s217
    %p219 = scmp.eq.s32.totalorder %s20, 0
    %p220 = por %p218, %p219
    %p221 = scmp.le.s32.totalorder 1, %s14
    %p222 = scmp.lt.s32.totalorder %s14, 3
    %p223 = pnand %p221, %p222
    %p224 = pneg %p223
    // Predicated region
    $region9: #{bottleneck_forward.1} parent=5 // pred_check
      _
    $region10: #{bottleneck_forward.1} parent=5 // pred_check_branch
      %226 = sbr.rel (%p223) target = $region12
    $region11: #{bottleneck_forward.1} parent=5 // pred_region
      %s227 = ssub.s32 %s14, 1
      // Predicated region
      $region13: #{bottleneck_forward.1} parent=11 // pred_check
        %p228 = pneg %p61
      $region14: #{bottleneck_forward.1} parent=11 // pred_check_branch
        %230 = sbr.rel (%p228) target = $region16
      $region15: #{bottleneck_forward.1} parent=11 // pred_region
        _
      $region16: #{bottleneck_forward.1} parent=11 // pred_fallthru
        _
      // Predicated region
      $region17: #{bottleneck_forward.1} parent=11 // pred_check
        %p231 = pneg %p82
      $region18: #{bottleneck_forward.1} parent=11 // pred_check_branch
        %233 = sbr.rel (%p231) target = $region20
      $region19: #{bottleneck_forward.1} parent=11 // pred_region
        _
      $region20: #{bottleneck_forward.1} parent=11 // pred_fallthru
        _
      // Predicated region
      $region21: #{bottleneck_forward.1} parent=11 // pred_check
        %p234 = pneg %p103
      $region22: #{bottleneck_forward.1} parent=11 // pred_check_branch
        %236 = sbr.rel (%p234) target = $region24
      $region23: #{bottleneck_forward.1} parent=11 // pred_region
        _
      $region24: #{bottleneck_forward.1} parent=11 // pred_fallthru
        _
      // Predicated region
      $region25: #{bottleneck_forward.1} parent=11 // pred_check
        %p237 = pneg %p124
      $region26: #{bottleneck_forward.1} parent=11 // pred_check_branch
        %239 = sbr.rel (%p237) target = $region28
      $region27: #{bottleneck_forward.1} parent=11 // pred_region
        _
      $region28: #{bottleneck_forward.1} parent=11 // pred_fallthru
        _
      // Predicated region
      $region29: #{bottleneck_forward.1} parent=11 // pred_check
        %p240 = pneg %p145
      $region30: #{bottleneck_forward.1} parent=11 // pred_check_branch
        %242 = sbr.rel (%p240) target = $region32
      $region31: #{bottleneck_forward.1} parent=11 // pred_region
        _
      $region32: #{bottleneck_forward.1} parent=11 // pred_fallthru
        _
      // Predicated region
      $region33: #{bottleneck_forward.1} parent=11 // pred_check
        %p243 = pneg %p166
      $region34: #{bottleneck_forward.1} parent=11 // pred_check_branch
        %245 = sbr.rel (%p243) target = $region36
      $region35: #{bottleneck_forward.1} parent=11 // pred_region
        _
      $region36: #{bottleneck_forward.1} parent=11 // pred_fallthru
        _
      // Predicated region
      $region37: #{bottleneck_forward.1} parent=11 // pred_check
        %p246 = pneg %p187
      $region38: #{bottleneck_forward.1} parent=11 // pred_check_branch
        %248 = sbr.rel (%p246) target = $region40
      $region39: #{bottleneck_forward.1} parent=11 // pred_region
        _
      $region40: #{bottleneck_forward.1} parent=11 // pred_fallthru
        _
    $region12: #{bottleneck_forward.1} parent=5 // pred_fallthru
      _
    %p249 = scmp.lt.s32.totalorder %s14, 2
    // Predicated region
    $region41: #{bottleneck_forward.1} parent=5 // pred_check
      %p250 = pneg %p249
    $region42: #{bottleneck_forward.1} parent=5 // pred_check_branch
      %252 = sbr.rel (%p250) target = $region44
    $region43: #{bottleneck_forward.1} parent=5 // pred_region
      // Predicated region
      $region45: #{bottleneck_forward.1} parent=43 // pred_check
        %p253 = pneg %p34
      $region46: #{bottleneck_forward.1} parent=43 // pred_check_branch
        %255 = sbr.rel (%p253) target = $region48
      $region47: #{bottleneck_forward.1} parent=43 // pred_region
        %p256 = scmp.lt.s32.totalorder %s14, 1
        %s257 = scalar_select %p256, %s14, 1
        %s258 = smul.addr %s257, 6
        %s259 = smul.addr %s258, 8
        %s260 = scalar_lea.vmem %s0, %s259
      $region48: #{bottleneck_forward.1} parent=43 // pred_fallthru
        _
    $region44: #{bottleneck_forward.1} parent=5 // pred_fallthru
      _
    %p261 = scmp.le.s32.totalorder 1, %s14
    %p262 = scmp.lt.s32.totalorder %s14, 3
    %p263 = pnand %p261, %p262
    %p264 = pneg %p263
    // Predicated region
    $region49: #{bottleneck_forward.1} parent=5 // pred_check
      _
    $region50: #{bottleneck_forward.1} parent=5 // pred_check_branch
      %266 = sbr.rel (%p263) target = $region52
    $region51: #{bottleneck_forward.1} parent=5 // pred_region
      %s267 = ssub.s32 %s14, 1
      %p268 = scmp.lt.s32.totalorder %s19, 1
      %s269 = scalar_select %p268, %s19, 1
      %s270 = smul.addr %s269, 6
      %s271 = smul.addr %s270, 8
      %s272 = scalar_lea.vmem %s0, %s271
      %p273 = pneg %p40
      %p274 = pneg %p37
      %p275 = pneg %p61
      %p276 = pneg %p58
      %p277 = pneg %p82
      %p278 = pneg %p79
      %p279 = pneg %p103
      %p280 = pneg %p100
      %p281 = pneg %p124
      %p282 = pneg %p121
      %p283 = pneg %p145
      %p284 = pneg %p142
      %p285 = pneg %p166
      %p286 = pneg %p163
      %p287 = pneg %p187
      %p288 = pneg %p184
      %p289 = pneg %p213
      %p290 = pneg %p210
      %p291 = scmp.lt.s32.totalorder %s19, 1
      %s292 = scalar_select %p291, %s19, 1
      %s293 = smul.addr %s292, 4
      %s294 = smul.addr %s293, 8
      %s295 = scalar_lea.vmem %s8, %s294
      %p296 = scmp.lt.s32.totalorder %s19, 1
      %s297 = scalar_select %p296, %s19, 1
      %s298 = smul.addr %s297, 6
      %s299 = smul.addr %s298, 8
      %s300 = scalar_lea.vmem %s0, %s299
      %p301 = scmp.lt.s32.totalorder %s19, 1
      %s302 = scalar_select %p301, %s19, 1
      %s303 = smul.addr %s302, 4
      %s304 = smul.addr %s303, 8
      %s305 = scalar_lea.vmem %s8, %s304
      %v307 = vld [vmem:[%s300] sm:$0xff]
      %v308 = vld [vmem:[%s300 + $0x8] sm:$0xff]
      %v309 = vld [vmem:[%s300 + $0x10] sm:$0xff]
      %v310 = vld [vmem:[%s300 + $0x18] sm:$0xff]
      %v311 = vld [vmem:[%s300 + $0x20] sm:$0xff]
      %v312 = vld [vmem:[%s300 + $0x28] sm:$0xff]
      %v313 = vld [vmem:[%s1] sm:$0xff]
      %v314 = vld [vmem:[%s1 + $0x8] sm:$0xff]
      %v315 = vld [vmem:[%s1 + $0x10] sm:$0xff]
      %317 = vset.pattern.permute.xlu0 0
      %318 = vperm.xlu0 %317, %v313
      %v319 = vpop.permute.xlu0 %318
      %322 = vset.pattern.permute.xlu0 0
      %323 = vperm.xlu0 %322, %v314
      %v324 = vpop.permute.xlu0 %323
      %327 = vset.pattern.permute.xlu0 0
      %328 = vperm.xlu0 %327, %v315
      %v329 = vpop.permute.xlu0 %328
      %v331 = vmul.f32 %v307, %v319
      %v332 = vmul.f32 %v308, %v319
      %v333 = vmul.f32 %v309, %v324
      %v334 = vmul.f32 %v310, %v324
      %v335 = vmul.f32 %v311, %v329
      %v336 = vmul.f32 %v312, %v329
      %v337 = vld [vmem:[%s2] sm:$0xff]
      %v338 = vld [vmem:[%s2 + $0x8] sm:$0xff]
      %v339 = vld [vmem:[%s2 + $0x10] sm:$0xff]
      %341 = vset.pattern.permute.xlu0 0
      %342 = vperm.xlu0 %341, %v337
      %v343 = vpop.permute.xlu0 %342
      %346 = vset.pattern.permute.xlu0 0
      %347 = vperm.xlu0 %346, %v338
      %v348 = vpop.permute.xlu0 %347
      %351 = vset.pattern.permute.xlu0 0
      %352 = vperm.xlu0 %351, %v339
      %v353 = vpop.permute.xlu0 %352
      %v355 = vadd.f32 %v331, %v343
      %v356 = vadd.f32 %v332, %v343
      %v357 = vadd.f32 %v333, %v348
      %v358 = vadd.f32 %v334, %v348
      %v359 = vadd.f32 %v335, %v353
      %v360 = vadd.f32 %v336, %v353
      %v361 = vmax.f32 %v355, 0.0
      %v362 = vmax.f32 %v356, 0.0
      %v363 = vmax.f32 %v357, 0.0
      %v364 = vmax.f32 %v358, 0.0
      %v365 = vmax.f32 %v359, 0.0
      %v366 = vmax.f32 %v360, 0.0
      %v367 = vld [vmem:[%s3] sm:$0xf]
      %v368 = vld [vmem:[%s3 + $0x4] sm:$0xf]
      %v369 = vld [vmem:[%s3 + $0x8] sm:$0xf]
      %v370 = vld [vmem:[%s3 + $0xc] sm:$0xf]
      %v371 = vld [vmem:[%s3 + $0x10] sm:$0xf]
      %v372 = vld [vmem:[%s3 + $0x14] sm:$0xf]
      %v373 = vpack.c.bf16 %v363, %v361
      %v374 = vpack.c.bf16 %v364, %v362
      %v375 = vpack.c.bf16 %v365, %v365
      %v376 = vpack.c.bf16 %v366, %v366
      %v383 = vunpack.c.l.b16 %v367
      %v384 = vunpack.c.l.b16 %v368
      %v385 = vunpack.c.l.b16 %v369
      %v386 = vunpack.c.l.b16 %v370
      %v387 = vunpack.c.l.b16 %v371
      %v388 = vunpack.c.l.b16 %v372
      %v389 = vpack.c.b16 %v384, %v383
      %v390 = vpack.c.b16 %v386, %v385
      %v391 = vpack.c.b16 %v388, %v387
      %vm392 = vcmask 195584
      %v394 = vsel %vm392, %v389, 0
      %v397 = vsel %vm392, %v390, 0
      %v400 = vsel %vm392, %v391, 0
      %vm402 = vcmask 1043456
      %v404 = vsel %vm402, %v375, 0
      %v407 = vsel %vm402, %v376, 0
      %409 = vmatpush.bf16.msra.mxu0 0
      %410 = vmatpush.bf16.msra.mxu0 0
      %411 = vmatpush.bf16.msra.mxu0 0
      %412 = vmatpush.bf16.msra.mxu0 0
      %413 = vmatpush.bf16.msra.mxu0 0
      %414 = vmatpush.bf16.msra.mxu0 0
      %415 = vmatpush.bf16.msra.mxu0 %v404
      %416 = vmatpush.bf16.msra.mxu0 %v373
      %417 = vmatmul.bf16.gmra.mxu0 %v394
      %v418 = vpop.f32.mrf.mxu0
      %v419 = vadd.f32 0.0, %v418
      %v420 = vpop.f32.mrf.mxu0
      %v421 = vadd.f32 0.0, %v420
      %422 = vmatmul.bf16.gmra.mxu0 %v397
      %v423 = vpop.f32.mrf.mxu0
      %v424 = vadd.f32 0.0, %v423
      %v425 = vpop.f32.mrf.mxu0
      %v426 = vadd.f32 0.0, %v425
      %427 = vmatmul.bf16.gmra.mxu0 %v400
      %v428 = vpop.f32.mrf.mxu0
      %v429 = vadd.f32 0.0, %v428
      %v430 = vpop.f32.mrf.mxu0
      %v431 = vadd.f32 0.0, %v430
      %432 = vdwg.mxu0
      %433 = vmatpush.bf16.msra.mxu0 0
      %434 = vmatpush.bf16.msra.mxu0 0
      %435 = vmatpush.bf16.msra.mxu0 0
      %436 = vmatpush.bf16.msra.mxu0 0
      %437 = vmatpush.bf16.msra.mxu0 0
      %438 = vmatpush.bf16.msra.mxu0 0
      %439 = vmatpush.bf16.msra.mxu0 %v407
      %440 = vmatpush.bf16.msra.mxu0 %v374
      %441 = vmatmul.bf16.gmra.mxu0 %v394
      %v442 = vpop.f32.mrf.mxu0
      %v443 = vadd.f32 0.0, %v442
      %v444 = vpop.f32.mrf.mxu0
      %v445 = vadd.f32 0.0, %v444
      %446 = vmatmul.bf16.gmra.mxu0 %v397
      %v447 = vpop.f32.mrf.mxu0
      %v448 = vadd.f32 0.0, %v447
      %v449 = vpop.f32.mrf.mxu0
      %v450 = vadd.f32 0.0, %v449
      %451 = vmatmul.bf16.gmra.mxu0 %v400
      %v452 = vpop.f32.mrf.mxu0
      %v453 = vadd.f32 0.0, %v452
      %v454 = vpop.f32.mrf.mxu0
      %v455 = vadd.f32 0.0, %v454
      %456 = vdwg.mxu0
      %v457 = vld [vmem:[%s4] sm:$0xff]
      %v458 = vld [vmem:[%s4 + $0x8] sm:$0xff]
      %v459 = vld [vmem:[%s4 + $0x10] sm:$0xff]
      %v460 = vld [vmem:[%s4 + $0x18] sm:$0xff]
      %v461 = vld [vmem:[%s4 + $0x20] sm:$0xff]
      %v462 = vld [vmem:[%s4 + $0x28] sm:$0xff]
      %464 = vset.pattern.permute.xlu0 0
      %465 = vperm.xlu0 %464, %v457
      %v466 = vpop.permute.xlu0 %465
      %469 = vset.pattern.permute.xlu0 0
      %470 = vperm.xlu0 %469, %v458
      %v471 = vpop.permute.xlu0 %470
      %474 = vset.pattern.permute.xlu0 0
      %475 = vperm.xlu0 %474, %v459
      %v476 = vpop.permute.xlu0 %475
      %479 = vset.pattern.permute.xlu0 0
      %480 = vperm.xlu0 %479, %v460
      %v481 = vpop.permute.xlu0 %480
      %484 = vset.pattern.permute.xlu0 0
      %485 = vperm.xlu0 %484, %v461
      %v486 = vpop.permute.xlu0 %485
      %489 = vset.pattern.permute.xlu0 0
      %490 = vperm.xlu0 %489, %v462
      %v491 = vpop.permute.xlu0 %490
      %v493 = vmul.f32 %v419, %v466
      %v494 = vmul.f32 %v443, %v466
      %v495 = vmul.f32 %v421, %v471
      %v496 = vmul.f32 %v445, %v471
      %v497 = vmul.f32 %v424, %v476
      %v498 = vmul.f32 %v448, %v476
      %v499 = vmul.f32 %v426, %v481
      %v500 = vmul.f32 %v450, %v481
      %v501 = vmul.f32 %v429, %v486
      %v502 = vmul.f32 %v453, %v486
      %v503 = vmul.f32 %v431, %v491
      %v504 = vmul.f32 %v455, %v491
      %v505 = vld [vmem:[%s5] sm:$0xff]
      %v506 = vld [vmem:[%s5 + $0x8] sm:$0xff]
      %v507 = vld [vmem:[%s5 + $0x10] sm:$0xff]
      %v508 = vld [vmem:[%s5 + $0x18] sm:$0xff]
      %v509 = vld [vmem:[%s5 + $0x20] sm:$0xff]
      %v510 = vld [vmem:[%s5 + $0x28] sm:$0xff]
      %512 = vset.pattern.permute.xlu0 0
      %513 = vperm.xlu0 %512, %v505
      %v514 = vpop.permute.xlu0 %513
      %517 = vset.pattern.permute.xlu0 0
      %518 = vperm.xlu0 %517, %v506
      %v519 = vpop.permute.xlu0 %518
      %522 = vset.pattern.permute.xlu0 0
      %523 = vperm.xlu0 %522, %v507
      %v524 = vpop.permute.xlu0 %523
      %527 = vset.pattern.permute.xlu0 0
      %528 = vperm.xlu0 %527, %v508
      %v529 = vpop.permute.xlu0 %528
      %532 = vset.pattern.permute.xlu0 0
      %533 = vperm.xlu0 %532, %v509
      %v534 = vpop.permute.xlu0 %533
      %537 = vset.pattern.permute.xlu0 0
      %538 = vperm.xlu0 %537, %v510
      %v539 = vpop.permute.xlu0 %538
      %v541 = vadd.f32 %v493, %v514
      %v542 = vadd.f32 %v494, %v514
      %v543 = vadd.f32 %v495, %v519
      %v544 = vadd.f32 %v496, %v519
      %v545 = vadd.f32 %v497, %v524
      %v546 = vadd.f32 %v498, %v524
      %v547 = vadd.f32 %v499, %v529
      %v548 = vadd.f32 %v500, %v529
      %v549 = vadd.f32 %v501, %v534
      %v550 = vadd.f32 %v502, %v534
      %v551 = vadd.f32 %v503, %v539
      %v552 = vadd.f32 %v504, %v539
      %v553 = vmax.f32 %v541, 0.0
      %v554 = vmax.f32 %v542, 0.0
      %v555 = vmax.f32 %v543, 0.0
      %v556 = vmax.f32 %v544, 0.0
      %v557 = vmax.f32 %v545, 0.0
      %v558 = vmax.f32 %v546, 0.0
      %v559 = vmax.f32 %v547, 0.0
      %v560 = vmax.f32 %v548, 0.0
      %v561 = vmax.f32 %v549, 0.0
      %v562 = vmax.f32 %v550, 0.0
      %v563 = vmax.f32 %v551, 0.0
      %v564 = vmax.f32 %v552, 0.0
      %v565 = vpack.c.bf16 %v555, %v553
      %v566 = vpack.c.bf16 %v556, %v554
      %v567 = vpack.c.bf16 %v559, %v557
      %v568 = vpack.c.bf16 %v560, %v558
      %v569 = vpack.c.bf16 %v563, %v561
      %v570 = vpack.c.bf16 %v564, %v562
      %v571 = vld [vmem:[%s6] sm:$0xf]
      %v572 = vld [vmem:[%s6 + $0x4] sm:$0x3]
      %v575 = vunpack.c.l.b16 %v571
      %v576 = vunpack.c.l.b16 %v572
      %v577 = vpack.c.b16 %v576, %v575
      %vm578 = vcmask 392192
      %v580 = vsel %vm578, %v577, 0
      %582 = vmatpush.bf16.msra.mxu0 0
      %583 = vmatpush.bf16.msra.mxu0 0
      %584 = vmatpush.bf16.msra.mxu0 0
      %585 = vmatpush.bf16.msra.mxu0 0
      %586 = vmatpush.bf16.msra.mxu0 0
      %587 = vmatpush.bf16.msra.mxu0 %v569
      %588 = vmatpush.bf16.msra.mxu0 %v567
      %589 = vmatpush.bf16.msra.mxu0 %v565
      %590 = vmatmul.bf16.gmra.mxu0 %v580
      %v591 = vpop.f32.mrf.mxu0
      %v592 = vadd.f32 0.0, %v591
      %v593 = vpop.f32.mrf.mxu0
      %v594 = vadd.f32 0.0, %v593
      %595 = vdwg.mxu0
      %596 = vmatpush.bf16.msra.mxu0 0
      %597 = vmatpush.bf16.msra.mxu0 0
      %598 = vmatpush.bf16.msra.mxu0 0
      %599 = vmatpush.bf16.msra.mxu0 0
      %600 = vmatpush.bf16.msra.mxu0 0
      %601 = vmatpush.bf16.msra.mxu0 %v570
      %602 = vmatpush.bf16.msra.mxu0 %v568
      %603 = vmatpush.bf16.msra.mxu0 %v566
      %604 = vmatmul.bf16.gmra.mxu0 %v580
      %v605 = vpop.f32.mrf.mxu0
      %v606 = vadd.f32 0.0, %v605
      %v607 = vpop.f32.mrf.mxu0
      %v608 = vadd.f32 0.0, %v607
      %609 = vdwg.mxu0
      %610 = vrot.lane.b32.xlu0 %v592, 17
      %v611 = vpop.permute.xlu0 %610
      %612 = vrot.lane.b32.xlu0 %v594, 17
      %v613 = vpop.permute.xlu0 %612
      %614 = vrot.lane.b32.xlu0 %v606, 17
      %v615 = vpop.permute.xlu0 %614
      %616 = vrot.lane.b32.xlu0 %v608, 17
      %v617 = vpop.permute.xlu0 %616
      %v618 = vlaneseq
      %v619 = vand.u32 %v618, 127
      %vm620 = vcmp.lt.s32.totalorder %v619, 17
      %v621 = vsel %vm620, %v611, %v615
      %v622 = vsel %vm620, %v613, %v617
      %v623 = vsel %vm620, %v615, %v611
      %v624 = vsel %vm620, %v617, %v613
      %v625 = vld [vmem:[%s7] sm:$0x3]
      %v627 = vperm.slane %v625, 0
      %v628 = vperm.slane %v625, 1
      %v631 = vmul.f32 %v623, %v627
      %v632 = vmul.f32 %v621, %v628
      %v633 = vmul.f32 %v624, %v627
      %v634 = vmul.f32 %v622, %v628
      %s635 = scalar_lea.vmem %s6, 8
      %v636 = vld [vmem:[%s635] sm:$0xf]
      %v637 = vld [vmem:[%s635 + $0x4] sm:$0x3]
      %v640 = vunpack.c.l.b16 %v636
      %v641 = vunpack.c.l.b16 %v637
      %v642 = vpack.c.b16 %v641, %v640
      %v644 = vsel %vm578, %v642, 0
      %646 = vmatpush.bf16.msra.mxu0 0
      %647 = vmatpush.bf16.msra.mxu0 0
      %648 = vmatpush.bf16.msra.mxu0 0
      %649 = vmatpush.bf16.msra.mxu0 0
      %650 = vmatpush.bf16.msra.mxu0 0
      %651 = vmatpush.bf16.msra.mxu0 %v569
      %652 = vmatpush.bf16.msra.mxu0 %v567
      %653 = vmatpush.bf16.msra.mxu0 %v565
      %654 = vmatmul.bf16.gmra.mxu0 %v644
      %v655 = vpop.f32.mrf.mxu0
      %v656 = vadd.f32 0.0, %v655
      %v657 = vpop.f32.mrf.mxu0
      %v658 = vadd.f32 0.0, %v657
      %659 = vdwg.mxu0
      %660 = vmatpush.bf16.msra.mxu0 0
      %661 = vmatpush.bf16.msra.mxu0 0
      %662 = vmatpush.bf16.msra.mxu0 0
      %663 = vmatpush.bf16.msra.mxu0 0
      %664 = vmatpush.bf16.msra.mxu0 0
      %665 = vmatpush.bf16.msra.mxu0 %v570
      %666 = vmatpush.bf16.msra.mxu0 %v568
      %667 = vmatpush.bf16.msra.mxu0 %v566
      %668 = vmatmul.bf16.gmra.mxu0 %v644
      %v669 = vpop.f32.mrf.mxu0
      %v670 = vadd.f32 0.0, %v669
      %v671 = vpop.f32.mrf.mxu0
      %v672 = vadd.f32 0.0, %v671
      %673 = vdwg.mxu0
      %674 = vrot.lane.b32.xlu0 %v656, 16
      %v675 = vpop.permute.xlu0 %674
      %676 = vrot.lane.b32.xlu0 %v658, 16
      %v677 = vpop.permute.xlu0 %676
      %678 = vrot.lane.b32.xlu0 %v670, 16
      %v679 = vpop.permute.xlu0 %678
      %680 = vrot.lane.b32.xlu0 %v672, 16
      %v681 = vpop.permute.xlu0 %680
      %vm682 = vcmp.lt.s32.totalorder %v619, 16
      %v683 = vsel %vm682, %v675, %v679
      %v684 = vsel %vm682, %v677, %v681
      %v685 = vsel %vm682, %v679, %v675
      %v686 = vsel %vm682, %v681, %v677
      %s687 = scalar_lea.vmem %s7, 2
      %v688 = vld [vmem:[%s687] sm:$0x3]
      %v690 = vperm.slane %v688, 0
      %v691 = vperm.slane %v688, 1
      %v694 = vmul.f32 %v685, %v690
      %v695 = vmul.f32 %v683, %v691
      %v696 = vmul.f32 %v686, %v690
      %v697 = vmul.f32 %v684, %v691
      %v698 = vadd.f32 %v631, %v694
      %v699 = vadd.f32 %v632, %v695
      %v700 = vadd.f32 %v633, %v696
      %v701 = vadd.f32 %v634, %v697
      %s702 = scalar_lea.vmem %s6, 16
      %v703 = vld [vmem:[%s702] sm:$0xf]
      %v704 = vld [vmem:[%s702 + $0x4] sm:$0x3]
      %v707 = vunpack.c.l.b16 %v703
      %v708 = vunpack.c.l.b16 %v704
      %v709 = vpack.c.b16 %v708, %v707
      %v711 = vsel %vm578, %v709, 0
      %713 = vmatpush.bf16.msra.mxu0 0
      %714 = vmatpush.bf16.msra.mxu0 0
      %715 = vmatpush.bf16.msra.mxu0 0
      %716 = vmatpush.bf16.msra.mxu0 0
      %717 = vmatpush.bf16.msra.mxu0 0
      %718 = vmatpush.bf16.msra.mxu0 %v569
      %719 = vmatpush.bf16.msra.mxu0 %v567
      %720 = vmatpush.bf16.msra.mxu0 %v565
      %721 = vmatmul.bf16.gmra.mxu0 %v711
      %v722 = vpop.f32.mrf.mxu0
      %v723 = vadd.f32 0.0, %v722
      %v724 = vpop.f32.mrf.mxu0
      %v725 = vadd.f32 0.0, %v724
      %726 = vdwg.mxu0
      %727 = vmatpush.bf16.msra.mxu0 0
      %728 = vmatpush.bf16.msra.mxu0 0
      %729 = vmatpush.bf16.msra.mxu0 0
      %730 = vmatpush.bf16.msra.mxu0 0
      %731 = vmatpush.bf16.msra.mxu0 0
      %732 = vmatpush.bf16.msra.mxu0 %v570
      %733 = vmatpush.bf16.msra.mxu0 %v568
      %734 = vmatpush.bf16.msra.mxu0 %v566
      %735 = vmatmul.bf16.gmra.mxu0 %v711
      %v736 = vpop.f32.mrf.mxu0
      %v737 = vadd.f32 0.0, %v736
      %v738 = vpop.f32.mrf.mxu0
      %v739 = vadd.f32 0.0, %v738
      %740 = vdwg.mxu0
      %741 = vrot.lane.b32.xlu0 %v723, 15
      %v742 = vpop.permute.xlu0 %741
      %743 = vrot.lane.b32.xlu0 %v725, 15
      %v744 = vpop.permute.xlu0 %743
      %745 = vrot.lane.b32.xlu0 %v737, 15
      %v746 = vpop.permute.xlu0 %745
      %747 = vrot.lane.b32.xlu0 %v739, 15
      %v748 = vpop.permute.xlu0 %747
      %vm749 = vcmp.lt.s32.totalorder %v619, 15
      %v750 = vsel %vm749, %v742, %v746
      %v751 = vsel %vm749, %v744, %v748
      %v752 = vsel %vm749, %v746, %v742
      %v753 = vsel %vm749, %v748, %v744
      %s754 = scalar_lea.vmem %s7, 4
      %v755 = vld [vmem:[%s754] sm:$0x3]
      %v757 = vperm.slane %v755, 0
      %v758 = vperm.slane %v755, 1
      %v761 = vmul.f32 %v752, %v757
      %v762 = vmul.f32 %v750, %v758
      %v763 = vmul.f32 %v753, %v757
      %v764 = vmul.f32 %v751, %v758
      %v765 = vadd.f32 %v698, %v761
      %v766 = vadd.f32 %v699, %v762
      %v767 = vadd.f32 %v700, %v763
      %v768 = vadd.f32 %v701, %v764
      %s769 = scalar_lea.vmem %s6, 24
      %v770 = vld [vmem:[%s769] sm:$0xf]
      %v771 = vld [vmem:[%s769 + $0x4] sm:$0x3]
      %v774 = vunpack.c.l.b16 %v770
      %v775 = vunpack.c.l.b16 %v771
      %v776 = vpack.c.b16 %v775, %v774
      %v778 = vsel %vm578, %v776, 0
      %780 = vmatpush.bf16.msra.mxu0 0
      %781 = vmatpush.bf16.msra.mxu0 0
      %782 = vmatpush.bf16.msra.mxu0 0
      %783 = vmatpush.bf16.msra.mxu0 0
      %784 = vmatpush.bf16.msra.mxu0 0
      %785 = vmatpush.bf16.msra.mxu0 %v569
      %786 = vmatpush.bf16.msra.mxu0 %v567
      %787 = vmatpush.bf16.msra.mxu0 %v565
      %788 = vmatmul.bf16.gmra.mxu0 %v778
      %v789 = vpop.f32.mrf.mxu0
      %v790 = vadd.f32 0.0, %v789
      %v791 = vpop.f32.mrf.mxu0
      %v792 = vadd.f32 0.0, %v791
      %793 = vdwg.mxu0
      %794 = vmatpush.bf16.msra.mxu0 0
      %795 = vmatpush.bf16.msra.mxu0 0
      %796 = vmatpush.bf16.msra.mxu0 0
      %797 = vmatpush.bf16.msra.mxu0 0
      %798 = vmatpush.bf16.msra.mxu0 0
      %799 = vmatpush.bf16.msra.mxu0 %v570
      %800 = vmatpush.bf16.msra.mxu0 %v568
      %801 = vmatpush.bf16.msra.mxu0 %v566
      %802 = vmatmul.bf16.gmra.mxu0 %v778
      %v803 = vpop.f32.mrf.mxu0
      %v804 = vadd.f32 0.0, %v803
      %v805 = vpop.f32.mrf.mxu0
      %v806 = vadd.f32 0.0, %v805
      %807 = vdwg.mxu0
      %808 = vrot.lane.b32.xlu0 %v790, 1
      %v809 = vpop.permute.xlu0 %808
      %810 = vrot.lane.b32.xlu0 %v792, 1
      %v811 = vpop.permute.xlu0 %810
      %812 = vrot.lane.b32.xlu0 %v804, 1
      %v813 = vpop.permute.xlu0 %812
      %814 = vrot.lane.b32.xlu0 %v806, 1
      %v815 = vpop.permute.xlu0 %814
      %vm816 = vcmp.lt.s32.totalorder %v619, 1
      %v817 = vsel %vm816, %v809, %v813
      %v818 = vsel %vm816, %v811, %v815
      %v819 = vsel %vm816, %v813, %v809
      %v820 = vsel %vm816, %v815, %v811
      %s821 = scalar_lea.vmem %s7, 6
      %v822 = vld [vmem:[%s821] sm:$0x3]
      %v824 = vperm.slane %v822, 0
      %v825 = vperm.slane %v822, 1
      %v828 = vmul.f32 %v819, %v824
      %v829 = vmul.f32 %v817, %v825
      %v830 = vmul.f32 %v820, %v824
      %v831 = vmul.f32 %v818, %v825
      %v832 = vadd.f32 %v765, %v828
      %v833 = vadd.f32 %v766, %v829
      %v834 = vadd.f32 %v767, %v830
      %v835 = vadd.f32 %v768, %v831
      %s836 = scalar_lea.vmem %s6, 32
      %v837 = vld [vmem:[%s836] sm:$0xf]
      %v838 = vld [vmem:[%s836 + $0x4] sm:$0x3]
      %v841 = vunpack.c.l.b16 %v837
      %v842 = vunpack.c.l.b16 %v838
      %v843 = vpack.c.b16 %v842, %v841
      %v845 = vsel %vm578, %v843, 0
      %847 = vmatpush.bf16.msra.mxu0 0
      %848 = vmatpush.bf16.msra.mxu0 0
      %849 = vmatpush.bf16.msra.mxu0 0
      %850 = vmatpush.bf16.msra.mxu0 0
      %851 = vmatpush.bf16.msra.mxu0 0
      %852 = vmatpush.bf16.msra.mxu0 %v569
      %853 = vmatpush.bf16.msra.mxu0 %v567
      %854 = vmatpush.bf16.msra.mxu0 %v565
      %855 = vmatmul.bf16.gmra.mxu0 %v845
      %v856 = vpop.f32.mrf.mxu0
      %v857 = vadd.f32 0.0, %v856
      %v858 = vpop.f32.mrf.mxu0
      %v859 = vadd.f32 0.0, %v858
      %860 = vdwg.mxu0
      %861 = vmatpush.bf16.msra.mxu0 0
      %862 = vmatpush.bf16.msra.mxu0 0
      %863 = vmatpush.bf16.msra.mxu0 0
      %864 = vmatpush.bf16.msra.mxu0 0
      %865 = vmatpush.bf16.msra.mxu0 0
      %866 = vmatpush.bf16.msra.mxu0 %v570
      %867 = vmatpush.bf16.msra.mxu0 %v568
      %868 = vmatpush.bf16.msra.mxu0 %v566
      %869 = vmatmul.bf16.gmra.mxu0 %v845
      %v870 = vpop.f32.mrf.mxu0
      %v871 = vadd.f32 0.0, %v870
      %v872 = vpop.f32.mrf.mxu0
      %v873 = vadd.f32 0.0, %v872
      %874 = vdwg.mxu0
      %v875 = vadd.f32 %v832, %v857
      %v876 = vadd.f32 %v833, %v871
      %v877 = vadd.f32 %v834, %v859
      %v878 = vadd.f32 %v835, %v873
      %s879 = scalar_lea.vmem %s6, 40
      %v880 = vld [vmem:[%s879] sm:$0xf]
      %v881 = vld [vmem:[%s879 + $0x4] sm:$0x3]
      %v884 = vunpack.c.l.b16 %v880
      %v885 = vunpack.c.l.b16 %v881
      %v886 = vpack.c.b16 %v885, %v884
      %v888 = vsel %vm578, %v886, 0
      %890 = vmatpush.bf16.msra.mxu0 0
      %891 = vmatpush.bf16.msra.mxu0 0
      %892 = vmatpush.bf16.msra.mxu0 0
      %893 = vmatpush.bf16.msra.mxu0 0
      %894 = vmatpush.bf16.msra.mxu0 0
      %895 = vmatpush.bf16.msra.mxu0 %v569
      %896 = vmatpush.bf16.msra.mxu0 %v567
      %897 = vmatpush.bf16.msra.mxu0 %v565
      %898 = vmatmul.bf16.gmra.mxu0 %v888
      %v899 = vpop.f32.mrf.mxu0
      %v900 = vadd.f32 0.0, %v899
      %v901 = vpop.f32.mrf.mxu0
      %v902 = vadd.f32 0.0, %v901
      %903 = vdwg.mxu0
      %904 = vmatpush.bf16.msra.mxu0 0
      %905 = vmatpush.bf16.msra.mxu0 0
      %906 = vmatpush.bf16.msra.mxu0 0
      %907 = vmatpush.bf16.msra.mxu0 0
      %908 = vmatpush.bf16.msra.mxu0 0
      %909 = vmatpush.bf16.msra.mxu0 %v570
      %910 = vmatpush.bf16.msra.mxu0 %v568
      %911 = vmatpush.bf16.msra.mxu0 %v566
      %912 = vmatmul.bf16.gmra.mxu0 %v888
      %v913 = vpop.f32.mrf.mxu0
      %v914 = vadd.f32 0.0, %v913
      %v915 = vpop.f32.mrf.mxu0
      %v916 = vadd.f32 0.0, %v915
      %917 = vdwg.mxu0
      %918 = vrot.lane.b32.xlu0 %v900, 127
      %v919 = vpop.permute.xlu0 %918
      %920 = vrot.lane.b32.xlu0 %v902, 127
      %v921 = vpop.permute.xlu0 %920
      %922 = vrot.lane.b32.xlu0 %v914, 127
      %v923 = vpop.permute.xlu0 %922
      %924 = vrot.lane.b32.xlu0 %v916, 127
      %v925 = vpop.permute.xlu0 %924
      %vm926 = vcmp.lt.s32.totalorder %v619, 127
      %v927 = vsel %vm926, %v919, %v923
      %v928 = vsel %vm926, %v921, %v925
      %v929 = vsel %vm926, %v923, %v919
      %v930 = vsel %vm926, %v925, %v921
      %s931 = scalar_lea.vmem %s7, 10
      %v932 = vld [vmem:[%s931] sm:$0x3]
      %v934 = vperm.slane %v932, 0
      %v935 = vperm.slane %v932, 1
      %v938 = vmul.f32 %v927, %v934
      %v939 = vmul.f32 %v929, %v935
      %v940 = vmul.f32 %v928, %v934
      %v941 = vmul.f32 %v930, %v935
      %v942 = vadd.f32 %v875, %v938
      %v943 = vadd.f32 %v876, %v939
      %v944 = vadd.f32 %v877, %v940
      %v945 = vadd.f32 %v878, %v941
      %s946 = scalar_lea.vmem %s6, 48
      %v947 = vld [vmem:[%s946] sm:$0xf]
      %v948 = vld [vmem:[%s946 + $0x4] sm:$0x3]
      %v951 = vunpack.c.l.b16 %v947
      %v952 = vunpack.c.l.b16 %v948
      %v953 = vpack.c.b16 %v952, %v951
      %v955 = vsel %vm578, %v953, 0
      %957 = vmatpush.bf16.msra.mxu0 0
      %958 = vmatpush.bf16.msra.mxu0 0
      %959 = vmatpush.bf16.msra.mxu0 0
      %960 = vmatpush.bf16.msra.mxu0 0
      %961 = vmatpush.bf16.msra.mxu0 0
      %962 = vmatpush.bf16.msra.mxu0 %v569
      %963 = vmatpush.bf16.msra.mxu0 %v567
      %964 = vmatpush.bf16.msra.mxu0 %v565
      %965 = vmatmul.bf16.gmra.mxu0 %v955
      %v966 = vpop.f32.mrf.mxu0
      %v967 = vadd.f32 0.0, %v966
      %v968 = vpop.f32.mrf.mxu0
      %v969 = vadd.f32 0.0, %v968
      %970 = vdwg.mxu0
      %971 = vmatpush.bf16.msra.mxu0 0
      %972 = vmatpush.bf16.msra.mxu0 0
      %973 = vmatpush.bf16.msra.mxu0 0
      %974 = vmatpush.bf16.msra.mxu0 0
      %975 = vmatpush.bf16.msra.mxu0 0
      %976 = vmatpush.bf16.msra.mxu0 %v570
      %977 = vmatpush.bf16.msra.mxu0 %v568
      %978 = vmatpush.bf16.msra.mxu0 %v566
      %979 = vmatmul.bf16.gmra.mxu0 %v955
      %v980 = vpop.f32.mrf.mxu0
      %v981 = vadd.f32 0.0, %v980
      %v982 = vpop.f32.mrf.mxu0
      %v983 = vadd.f32 0.0, %v982
      %984 = vdwg.mxu0
      %985 = vrot.lane.b32.xlu0 %v967, 113
      %v986 = vpop.permute.xlu0 %985
      %987 = vrot.lane.b32.xlu0 %v969, 113
      %v988 = vpop.permute.xlu0 %987
      %989 = vrot.lane.b32.xlu0 %v981, 113
      %v990 = vpop.permute.xlu0 %989
      %991 = vrot.lane.b32.xlu0 %v983, 113
      %v992 = vpop.permute.xlu0 %991
      %vm993 = vcmp.lt.s32.totalorder %v619, 113
      %v994 = vsel %vm993, %v986, %v990
      %v995 = vsel %vm993, %v988, %v992
      %v996 = vsel %vm993, %v990, %v986
      %v997 = vsel %vm993, %v992, %v988
      %s998 = scalar_lea.vmem %s7, 12
      %v999 = vld [vmem:[%s998] sm:$0x3]
      %v1001 = vperm.slane %v999, 0
      %v1002 = vperm.slane %v999, 1
      %v1005 = vmul.f32 %v994, %v1001
      %v1006 = vmul.f32 %v996, %v1002
      %v1007 = vmul.f32 %v995, %v1001
      %v1008 = vmul.f32 %v997, %v1002
      %v1009 = vadd.f32 %v942, %v1005
      %v1010 = vadd.f32 %v943, %v1006
      %v1011 = vadd.f32 %v944, %v1007
      %v1012 = vadd.f32 %v945, %v1008
      %s1013 = scalar_lea.vmem %s6, 56
      %v1014 = vld [vmem:[%s1013] sm:$0xf]
      %v1015 = vld [vmem:[%s1013 + $0x4] sm:$0x3]
      %v1018 = vunpack.c.l.b16 %v1014
      %v1019 = vunpack.c.l.b16 %v1015
      %v1020 = vpack.c.b16 %v1019, %v1018
      %v1022 = vsel %vm578, %v1020, 0
      %1024 = vmatpush.bf16.msra.mxu0 0
      %1025 = vmatpush.bf16.msra.mxu0 0
      %1026 = vmatpush.bf16.msra.mxu0 0
      %1027 = vmatpush.bf16.msra.mxu0 0
      %1028 = vmatpush.bf16.msra.mxu0 0
      %1029 = vmatpush.bf16.msra.mxu0 %v569
      %1030 = vmatpush.bf16.msra.mxu0 %v567
      %1031 = vmatpush.bf16.msra.mxu0 %v565
      %1032 = vmatmul.bf16.gmra.mxu0 %v1022
      %v1033 = vpop.f32.mrf.mxu0
      %v1034 = vadd.f32 0.0, %v1033
      %v1035 = vpop.f32.mrf.mxu0
      %v1036 = vadd.f32 0.0, %v1035
      %1037 = vdwg.mxu0
      %1038 = vmatpush.bf16.msra.mxu0 0
      %1039 = vmatpush.bf16.msra.mxu0 0
      %1040 = vmatpush.bf16.msra.mxu0 0
      %1041 = vmatpush.bf16.msra.mxu0 0
      %1042 = vmatpush.bf16.msra.mxu0 0
      %1043 = vmatpush.bf16.msra.mxu0 %v570
      %1044 = vmatpush.bf16.msra.mxu0 %v568
      %1045 = vmatpush.bf16.msra.mxu0 %v566
      %1046 = vmatmul.bf16.gmra.mxu0 %v1022
      %v1047 = vpop.f32.mrf.mxu0
      %v1048 = vadd.f32 0.0, %v1047
      %v1049 = vpop.f32.mrf.mxu0
      %v1050 = vadd.f32 0.0, %v1049
      %1051 = vdwg.mxu0
      %1052 = vrot.lane.b32.xlu0 %v1034, 112
      %v1053 = vpop.permute.xlu0 %1052
      %1054 = vrot.lane.b32.xlu0 %v1036, 112
      %v1055 = vpop.permute.xlu0 %1054
      %1056 = vrot.lane.b32.xlu0 %v1048, 112
      %v1057 = vpop.permute.xlu0 %1056
      %1058 = vrot.lane.b32.xlu0 %v1050, 112
      %v1059 = vpop.permute.xlu0 %1058
      %vm1060 = vcmp.lt.s32.totalorder %v619, 112
      %v1061 = vsel %vm1060, %v1053, %v1057
      %v1062 = vsel %vm1060, %v1055, %v1059
      %v1063 = vsel %vm1060, %v1057, %v1053
      %v1064 = vsel %vm1060, %v1059, %v1055
      %s1065 = scalar_lea.vmem %s7, 14
      %v1066 = vld [vmem:[%s1065] sm:$0x3]
      %v1068 = vperm.slane %v1066, 0
      %v1069 = vperm.slane %v1066, 1
      %v1072 = vmul.f32 %v1061, %v1068
      %v1073 = vmul.f32 %v1063, %v1069
      %v1074 = vmul.f32 %v1062, %v1068
      %v1075 = vmul.f32 %v1064, %v1069
      %v1076 = vadd.f32 %v1009, %v1072
      %v1077 = vadd.f32 %v1010, %v1073
      %v1078 = vadd.f32 %v1011, %v1074
      %v1079 = vadd.f32 %v1012, %v1075
      %s1080 = scalar_lea.vmem %s6, 64
      %v1081 = vld [vmem:[%s1080] sm:$0xf]
      %v1082 = vld [vmem:[%s1080 + $0x4] sm:$0x3]
      %v1085 = vunpack.c.l.b16 %v1081
      %v1086 = vunpack.c.l.b16 %v1082
      %v1087 = vpack.c.b16 %v1086, %v1085
      %v1089 = vsel %vm578, %v1087, 0
      %1091 = vmatpush.bf16.msra.mxu0 0
      %1092 = vmatpush.bf16.msra.mxu0 0
      %1093 = vmatpush.bf16.msra.mxu0 0
      %1094 = vmatpush.bf16.msra.mxu0 0
      %1095 = vmatpush.bf16.msra.mxu0 0
      %1096 = vmatpush.bf16.msra.mxu0 %v569
      %1097 = vmatpush.bf16.msra.mxu0 %v567
      %1098 = vmatpush.bf16.msra.mxu0 %v565
      %1099 = vmatmul.bf16.gmra.mxu0 %v1089
      %v1100 = vpop.f32.mrf.mxu0
      %v1101 = vadd.f32 0.0, %v1100
      %v1102 = vpop.f32.mrf.mxu0
      %v1103 = vadd.f32 0.0, %v1102
      %1104 = vdwg.mxu0
      %1105 = vmatpush.bf16.msra.mxu0 0
      %1106 = vmatpush.bf16.msra.mxu0 0
      %1107 = vmatpush.bf16.msra.mxu0 0
      %1108 = vmatpush.bf16.msra.mxu0 0
      %1109 = vmatpush.bf16.msra.mxu0 0
      %1110 = vmatpush.bf16.msra.mxu0 %v570
      %1111 = vmatpush.bf16.msra.mxu0 %v568
      %1112 = vmatpush.bf16.msra.mxu0 %v566
      %1113 = vmatmul.bf16.gmra.mxu0 %v1089
      %v1114 = vpop.f32.mrf.mxu0
      %v1115 = vadd.f32 0.0, %v1114
      %v1116 = vpop.f32.mrf.mxu0
      %v1117 = vadd.f32 0.0, %v1116
      %1118 = vdwg.mxu0
      %1119 = vrot.lane.b32.xlu0 %v1101, 111
      %v1120 = vpop.permute.xlu0 %1119
      %1121 = vrot.lane.b32.xlu0 %v1103, 111
      %v1122 = vpop.permute.xlu0 %1121
      %1123 = vrot.lane.b32.xlu0 %v1115, 111
      %v1124 = vpop.permute.xlu0 %1123
      %1125 = vrot.lane.b32.xlu0 %v1117, 111
      %v1126 = vpop.permute.xlu0 %1125
      %vm1127 = vcmp.lt.s32.totalorder %v619, 111
      %v1128 = vsel %vm1127, %v1120, %v1124
      %v1129 = vsel %vm1127, %v1122, %v1126
      %v1130 = vsel %vm1127, %v1124, %v1120
      %v1131 = vsel %vm1127, %v1126, %v1122
      %s1132 = scalar_lea.vmem %s7, 16
      %v1133 = vld [vmem:[%s1132] sm:$0x3]
      %v1135 = vperm.slane %v1133, 0
      %v1136 = vperm.slane %v1133, 1
      %v1139 = vmul.f32 %v1128, %v1135
      %v1140 = vmul.f32 %v1130, %v1136
      %v1141 = vmul.f32 %v1129, %v1135
      %v1142 = vmul.f32 %v1131, %v1136
      %v1143 = vadd.f32 %v1076, %v1139
      %v1144 = vadd.f32 %v1077, %v1140
      %v1145 = vadd.f32 %v1078, %v1141
      %v1146 = vadd.f32 %v1079, %v1142
      %1147 = vst [vmem:[%s305] sm:$0xff] %v1143
      %1148 = vst [vmem:[%s305 + $0x8] sm:$0xff] %v1144
      %1149 = vst [vmem:[%s305 + $0x10] sm:$0xf] %v1145
      %1150 = vst [vmem:[%s305 + $0x18] sm:$0xf] %v1146
      %p1151 = scmp.lt.s32.totalorder %s19, 1
      %s1152 = scalar_select %p1151, %s19, 1
      %s1153 = smul.addr %s1152, 4
      %s1154 = smul.addr %s1153, 8
      %s1155 = scalar_lea.vmem %s8, %s1154
      // Predicated region
      $region53: #{bottleneck_forward.1} parent=51 // pred_check
        %p1156 = pneg %p210
      $region54: #{bottleneck_forward.1} parent=51 // pred_check_branch
        %1158 = sbr.rel (%p1156) target = $region56
      $region55: #{bottleneck_forward.1} parent=51 // pred_region
        _
      $region56: #{bottleneck_forward.1} parent=51 // pred_fallthru
        _
    $region52: #{bottleneck_forward.1} parent=5 // pred_fallthru
      _
    %p1159 = scmp.le.s32.totalorder 2, %s14
    // Predicated region
    $region57: #{bottleneck_forward.1} parent=5 // pred_check
      %p1160 = pneg %p1159
    $region58: #{bottleneck_forward.1} parent=5 // pred_check_branch
      %1162 = sbr.rel (%p1160) target = $region60
    $region59: #{bottleneck_forward.1} parent=5 // pred_region
      %s1163 = ssub.s32 %s14, 2
      // Predicated region
      $region61: #{bottleneck_forward.1} parent=59 // pred_check
        %p1164 = pneg %p216
      $region62: #{bottleneck_forward.1} parent=59 // pred_check_branch
        %1166 = sbr.rel (%p1164) target = $region64
      $region63: #{bottleneck_forward.1} parent=59 // pred_region
        %p1167 = scmp.lt.s32.totalorder %s20, 1
        %s1168 = scalar_select %p1167, %s20, 1
        %s1169 = smul.addr %s1168, 4
        %s1170 = smul.addr %s1169, 8
        %s1171 = scalar_lea.vmem %s8, %s1170
      $region64: #{bottleneck_forward.1} parent=59 // pred_fallthru
        _
    $region60: #{bottleneck_forward.1} parent=5 // pred_fallthru
      _
  $region6: #{bottleneck_forward.1} parent=0 // loop_footer
    %s18 = sadd.s32 1, %s14
  $region7: #{bottleneck_forward.1} parent=0 // loop_footer_branch
    %13 = sbr.rel target = $region3
  $region8: #{bottleneck_forward.1} parent=0 // loop_exit
    _

</llo_original>
